<compile_context>
chip_gen: v7x
topology: tpu7x:2x2x1
jax: 0.10.0
libtpu: 0.0.40
codegen_flags: <defaults>
</compile_context>

<pallas_src>
import jax
import jax.numpy as jnp
from jax.experimental import pallas as pl
from jax.experimental.pallas import tpu as pltpu


def _round_up(n, m):
    return ((n + m - 1) // m) * m


def _generator_kernel(x_ref, w1_ref, b1_ref, w2_ref, b2_ref, o_ref):
    # First linear layer: (TB, Z) @ (Z, H) -> f32 accumulator on the MXU.
    h = jnp.dot(x_ref[...], w1_ref[...], preferred_element_type=jnp.float32)
    h = h + b1_ref[...]          # bias (1, H) broadcasts over the batch tile
    # LeakyReLU(negative_slope=0.01), f32 on the VPU.
    h = jnp.where(h >= 0, h, 0.01 * h)
    # Second linear layer: cast hidden to the weight dtype for the MXU,
    # accumulate in f32.
    y = jnp.dot(h.astype(w2_ref.dtype), w2_ref[...],
                preferred_element_type=jnp.float32)
    y = y + b2_ref[...]
    # Tanh on the EUP, single downcast at the store.
    o_ref[...] = jnp.tanh(y).astype(o_ref.dtype)


def generator_forward(x, w1, b1, w2, b2, *, block_b=256, compute_dtype=None):
    """Fused 2-layer MLP generator forward.

    x : (B, z_dim)
    w1: (z_dim, 256), b1: (256,) or (1, 256)
    w2: (256, img_dim), b2: (img_dim,) or (1, img_dim)
    returns (B, img_dim) in x's original dtype.

    compute_dtype: optional dtype (e.g. jnp.bfloat16) for x / w1 / w2 fed to
    the MXU; accumulation and elementwise math stay f32.
    """
    B, Z = x.shape
    H = w1.shape[1]
    D = w2.shape[1]
    out_dtype = x.dtype

    if compute_dtype is not None:
        x = x.astype(compute_dtype)
        w1 = w1.astype(compute_dtype)
        w2 = w2.astype(compute_dtype)

    # Biases are added on the f32 accumulator -> keep them f32.
    b1 = jnp.asarray(b1, jnp.float32).reshape(1, H)
    b2 = jnp.asarray(b2, jnp.float32).reshape(1, D)

    # Lane-dense output: pad img_dim up to a multiple of 128 (zero columns,
    # sliced off after the call).
    Dp = _round_up(D, 128)
    if Dp != D:
        w2 = jnp.pad(w2, ((0, 0), (0, Dp - D)))
        b2 = jnp.pad(b2, ((0, 0), (0, Dp - D)))

    # Batch tile: a multiple of 8 sublanes, capped at block_b (>=256 fills
    # the v6e/v7x MXU); tiny batches collapse to a single grid step.
    tb = min(block_b, _round_up(B, 8))
    Bp = _round_up(B, tb)
    if Bp != B:
        x = jnp.pad(x, ((0, Bp - B), (0, 0)))

    grid = (Bp // tb,)

    itemsize = jnp.dtype(x.dtype).itemsize
    bytes_accessed = int(
        Bp * Z * itemsize                          # x
        + Z * H * itemsize + H * 4                 # w1, b1
        + H * Dp * itemsize + Dp * 4               # w2, b2
        + Bp * Dp * jnp.dtype(out_dtype).itemsize  # out
    )
    cost = pl.CostEstimate(
        flops=int(2 * Bp * (Z * H + H * Dp)),
        transcendentals=int(Bp * Dp),
        bytes_accessed=bytes_accessed,
    )

    out = pl.pallas_call(
        _generator_kernel,
        out_shape=jax.ShapeDtypeStruct((Bp, Dp), out_dtype),
        grid_spec=pl.GridSpec(
            grid=grid,
            in_specs=[
                pl.BlockSpec((tb, Z), lambda i: (i, 0)),   # x: tiled over batch
                pl.BlockSpec((Z, H), lambda i: (0, 0)),    # w1: resident
                pl.BlockSpec((1, H), lambda i: (0, 0)),    # b1: resident
                pl.BlockSpec((H, Dp), lambda i: (0, 0)),   # w2: resident
                pl.BlockSpec((1, Dp), lambda i: (0, 0)),   # b2: resident
            ],
            out_specs=pl.BlockSpec((tb, Dp), lambda i: (i, 0)),
        ),
        compiler_params=pltpu.CompilerParams(
            dimension_semantics=("parallel",),  # megacore-shard batch tiles
        ),
        cost_estimate=cost,
    )(x, w1, b1, w2, b2)

    return out[:B, :D]


def init_params(key, z_dim, img_dim, hidden=256, dtype=jnp.float32):
    """Parameter init mirroring PyTorch nn.Linear defaults
    (uniform(-1/sqrt(fan_in), 1/sqrt(fan_in))); weights stored as (in, out)."""
    k1, k2, k3, k4 = jax.random.split(key, 4)
    bound1 = 1.0 / (z_dim ** 0.5)
    bound2 = 1.0 / (hidden ** 0.5)
    w1 = jax.random.uniform(k1, (z_dim, hidden), dtype, -bound1, bound1)
    b1 = jax.random.uniform(k2, (1, hidden), dtype, -bound1, bound1)
    w2 = jax.random.uniform(k3, (hidden, img_dim), dtype, -bound2, bound2)
    b2 = jax.random.uniform(k4, (1, img_dim), dtype, -bound2, bound2)
    return w1, b1, w2, b2


def reference_forward(x, w1, b1, w2, b2):
    h = x @ w1 + b1
    h = jnp.where(h >= 0, h, 0.01 * h)
    return jnp.tanh(h @ w2 + b2)


if __name__ == "__main__":
    # Small shapes that still exercise batch padding (12 -> 16) and the
    # 128-lane output padding (200 -> 256).
    batch = 12
    z_dim = 32
    img_dim = 200
    dtype = jnp.float32

    key = jax.random.PRNGKey(0)
    kx, kp = jax.random.split(key)
    x = jax.random.normal(kx, (batch, z_dim), dtype)
    w1, b1, w2, b2 = init_params(kp, z_dim, img_dim, dtype=dtype)

    ref = reference_forward(x, w1, b1, w2, b2)

    # f32 path (strict tolerance).
    out = generator_forward(x, w1, b1, w2, b2)
    out = jax.block_until_ready(out)
    assert out.shape == (batch, img_dim)
    assert jnp.allclose(out, ref, atol=1e-5, rtol=1e-5), "f32 mismatch vs reference"

    # bf16 compute path (f32 accumulation; relaxed tolerance).
    out_bf16 = generator_forward(x, w1, b1, w2, b2, compute_dtype=jnp.bfloat16)
    out_bf16 = jax.block_until_ready(out_bf16)
    assert out_bf16.shape == (batch, img_dim)
    assert jnp.allclose(out_bf16, ref, atol=5e-2, rtol=5e-2), "bf16 mismatch vs reference"

    print("KERNEL_OK")
</pallas_src>

<mosaic_0001>
module attributes {stable_mosaic.version = 11 : i64} {
  func.func @_generator_kernel(%arg0: i32, %arg1: memref<16x32xf32, #tpu.memory_space<vmem>>, %arg2: memref<32x256xf32, #tpu.memory_space<vmem>>, %arg3: memref<1x256xf32, #tpu.memory_space<vmem>>, %arg4: memref<256x256xf32, #tpu.memory_space<vmem>>, %arg5: memref<1x256xf32, #tpu.memory_space<vmem>>, %arg6: memref<16x256xf32, #tpu.memory_space<vmem>>) attributes {dimension_semantics = [#tpu.dimension_semantics<parallel>], iteration_bounds = array<i64: 1>, scalar_prefetch = 0 : i64, scratch_operands = 0 : i64, tpu.core_type = #tpu.core_type<tc>, window_params = [{transform_indices = @transform_0, window_bounds = array<i64: 16, 32>}, {pipeline_mode = #tpu.pipeline_mode<synchronous>, transform_indices = @transform_1, window_bounds = array<i64: 32, 256>}, {pipeline_mode = #tpu.pipeline_mode<synchronous>, transform_indices = @transform_2, window_bounds = array<i64: 1, 256>}, {pipeline_mode = #tpu.pipeline_mode<synchronous>, transform_indices = @transform_3, window_bounds = array<i64: 256, 256>}, {pipeline_mode = #tpu.pipeline_mode<synchronous>, transform_indices = @transform_4, window_bounds = array<i64: 1, 256>}, {transform_indices = @transform_5, window_bounds = array<i64: 16, 256>}]} {
    %c0 = arith.constant 0 : index
    %c0_0 = arith.constant 0 : index
    %0 = vector.load %arg1[%c0, %c0_0] : memref<16x32xf32, #tpu.memory_space<vmem>>, vector<16x32xf32>
    %c0_1 = arith.constant 0 : index
    %c0_2 = arith.constant 0 : index
    %1 = vector.load %arg2[%c0_1, %c0_2] : memref<32x256xf32, #tpu.memory_space<vmem>>, vector<32x256xf32>
    %cst = arith.constant dense<0.000000e+00> : vector<16x256xf32>
    %2 = tpu.matmul %0, %1, %cst {dimension_numbers = #tpu.dot_dimension_numbers<[1], [0], [0], [1], [0, 0, 1, 1], [], []>} : vector<16x32xf32>, vector<32x256xf32>, vector<16x256xf32> -> vector<16x256xf32>
    %c0_3 = arith.constant 0 : index
    %c0_4 = arith.constant 0 : index
    %3 = vector.load %arg3[%c0_3, %c0_4] : memref<1x256xf32, #tpu.memory_space<vmem>>, vector<1x256xf32>
    %4 = vector.broadcast %3 : vector<1x256xf32> to vector<16x256xf32>
    %5 = arith.addf %2, %4 : vector<16x256xf32>
    %cst_5 = arith.constant 0.000000e+00 : f32
    %6 = vector.broadcast %cst_5 : f32 to vector<16x256xf32>
    %7 = arith.cmpf oge, %5, %6 : vector<16x256xf32>
    %cst_6 = arith.constant 0.00999999977 : f32
    %8 = vector.broadcast %cst_6 : f32 to vector<16x256xf32>
    %9 = arith.mulf %8, %5 : vector<16x256xf32>
    %10 = arith.select %7, %5, %9 : vector<16x256xi1>, vector<16x256xf32>
    %c0_7 = arith.constant 0 : index
    %c0_8 = arith.constant 0 : index
    %11 = vector.load %arg4[%c0_7, %c0_8] : memref<256x256xf32, #tpu.memory_space<vmem>>, vector<256x256xf32>
    %cst_9 = arith.constant dense<0.000000e+00> : vector<16x256xf32>
    %12 = tpu.matmul %10, %11, %cst_9 {dimension_numbers = #tpu.dot_dimension_numbers<[1], [0], [0], [1], [0, 0, 1, 1], [], []>} : vector<16x256xf32>, vector<256x256xf32>, vector<16x256xf32> -> vector<16x256xf32>
    %c0_10 = arith.constant 0 : index
    %c0_11 = arith.constant 0 : index
    %13 = vector.load %arg5[%c0_10, %c0_11] : memref<1x256xf32, #tpu.memory_space<vmem>>, vector<1x256xf32>
    %14 = vector.broadcast %13 : vector<1x256xf32> to vector<16x256xf32>
    %15 = arith.addf %12, %14 : vector<16x256xf32>
    %16 = math.tanh %15 : vector<16x256xf32>
    %c0_12 = arith.constant 0 : index
    %c0_13 = arith.constant 0 : index
    %17 = vector.load %arg6[%c0_12, %c0_13] : memref<16x256xf32, #tpu.memory_space<vmem>>, vector<16x256xf32>
    tpu.vector_store %arg6[%c0_12, %c0_13], %16 {strides = array<i32>} : memref<16x256xf32, #tpu.memory_space<vmem>>, vector<16x256xf32>,
    return
  }
  func.func @transform_0(%arg0: i32) -> (i32, i32) {
    %c0_i32 = arith.constant 0 : i32
    %c0_i32_0 = arith.constant 0 : i32
    return %arg0, %c0_i32 : i32, i32
  }
  func.func @transform_1(%arg0: i32) -> (i32, i32) {
    %c0_i32 = arith.constant 0 : i32
    %c0_i32_0 = arith.constant 0 : i32
    %c0_i32_1 = arith.constant 0 : i32
    return %c0_i32, %c0_i32_0 : i32, i32
  }
  func.func @transform_2(%arg0: i32) -> (i32, i32) {
    %c0_i32 = arith.constant 0 : i32
    %c0_i32_0 = arith.constant 0 : i32
    %c0_i32_1 = arith.constant 0 : i32
    return %c0_i32, %c0_i32_0 : i32, i32
  }
  func.func @transform_3(%arg0: i32) -> (i32, i32) {
    %c0_i32 = arith.constant 0 : i32
    %c0_i32_0 = arith.constant 0 : i32
    %c0_i32_1 = arith.constant 0 : i32
    return %c0_i32, %c0_i32_0 : i32, i32
  }
  func.func @transform_4(%arg0: i32) -> (i32, i32) {
    %c0_i32 = arith.constant 0 : i32
    %c0_i32_0 = arith.constant 0 : i32
    %c0_i32_1 = arith.constant 0 : i32
    return %c0_i32, %c0_i32_0 : i32, i32
  }
  func.func @transform_5(%arg0: i32) -> (i32, i32) {
    %c0_i32 = arith.constant 0 : i32
    %c0_i32_0 = arith.constant 0 : i32
    return %arg0, %c0_i32 : i32, i32
  }
}

</mosaic_0001>

<llo_original>
// kernel: tpu_custom_call.1
$region0: #{tpu_custom_call.1}
  #allocation0 [shape = 'u32[]', space=smem, size = 0x4, offset = 0x4, fixed_abs, tag = 'smem constant byte address 0x4 - core index']
  #allocation1 [shape = 'u32[144,128]{1,0:T(1,128)}', space=vmem, size = 0x12000, scoped, tag = 'internal scratch']
  %s0 = inlined_call_operand.hbm [shape: f32[16,32], index: 0, kind: input, shape index: {}]
  %s1 = inlined_call_operand.hbm [shape: f32[32,256], index: 1, kind: input, shape index: {}]
  %s2 = inlined_call_operand.vmem [shape: f32[1,256], index: 2, kind: input, shape index: {}]
  %s3 = inlined_call_operand.hbm [shape: f32[256,256], index: 3, kind: input, shape index: {}]
  %s4 = inlined_call_operand.vmem [shape: f32[1,256], index: 4, kind: input, shape index: {}]
  %s5 = inlined_call_operand.hbm [shape: f32[16,256], index: 5, kind: output, shape index: {}]
  %s6 = sld [smem:[#allocation0]]
  $region42: #{tpu_custom_call.1} parent=0
    _
  %s8 = ssub.s32 1, %s6
  %s9 = scalar_select 0, %s8, %s6
  $region1: #{tpu_custom_call.1} parent=0
    #allocation2 [shape = 'u8[8192]{0}', space=vmem, size = 0x2000, scoped, tag = 'input window, operand 0, single buffered']
    #allocation3 [shape = 's32[1]{0}', space=sflag, size = 0x4, scoped, tag = 'scoped memory for tpu_custom_call.1']
    #allocation4 [shape = 's32[1]{0}', space=sflag, size = 0x4, scoped, tag = 'scoped memory for tpu_custom_call.1']
    #allocation5 [shape = 'u8[32768]{0}', space=vmem, size = 0x8000, scoped, tag = 'input window, operand 1, single buffered']
    #allocation6 [shape = 's32[1]{0}', space=sflag, size = 0x4, scoped, tag = 'scoped memory for tpu_custom_call.1']
    #allocation7 [shape = 'u8[262144]{0}', space=vmem, size = 0x40000, scoped, tag = 'input window, operand 3, single buffered']
    #allocation8 [shape = 'u8[16384]{0}', space=vmem, size = 0x4000, scoped, tag = 'output window, operand 0, single buffered']
    %10 = vsyncpa [#allocation3], 0
    %11 = vsyncpa [#allocation6], 0
    %12 = vsyncpa [#allocation4], 0
    // Predicated region
    $region2: #{tpu_custom_call.1} parent=1 // pred_check
      _
    $region3: #{tpu_custom_call.1} parent=1 // pred_check_branch
      %14 = sbr.rel (0) target = $region5
    $region4: #{tpu_custom_call.1} parent=1 // pred_region
      %s16 = ssub.s32 256, 256
      %17 = vsyncadd [#allocation3], %s16
      %s18 = sshll.u32 [#allocation2], 4
      %s19 = int_to_ptr.vmem [resolvable:$true] %s18
      %24 = dma.hbm_to_vmem [thread:$0]  %s0, 256, %s19, [#allocation3], 128, 128, 8
    $region5: #{tpu_custom_call.1} parent=1 // pred_fallthru
      _
    // Predicated region
    $region6: #{tpu_custom_call.1} parent=1 // pred_check
      _
    $region7: #{tpu_custom_call.1} parent=1 // pred_check_branch
      %26 = sbr.rel (0) target = $region9
    $region8: #{tpu_custom_call.1} parent=1 // pred_region
      %s28 = ssub.s32 1024, 1024
      %29 = vsyncadd [#allocation6], %s28
      %s30 = sshll.u32 [#allocation5], 4
      %s31 = int_to_ptr.vmem [resolvable:$true] %s30
      %36 = dma.hbm_to_vmem [thread:$0]  %s1, 1024, %s31, [#allocation6], 256, 256, 16
    $region9: #{tpu_custom_call.1} parent=1 // pred_fallthru
      _
    // Predicated region
    $region10: #{tpu_custom_call.1} parent=1 // pred_check
      _
    $region11: #{tpu_custom_call.1} parent=1 // pred_check_branch
      %38 = sbr.rel (0) target = $region13
    $region12: #{tpu_custom_call.1} parent=1 // pred_region
      _
    $region13: #{tpu_custom_call.1} parent=1 // pred_fallthru
      _
    // Predicated region
    $region14: #{tpu_custom_call.1} parent=1 // pred_check
      _
    $region15: #{tpu_custom_call.1} parent=1 // pred_check_branch
      %40 = sbr.rel (0) target = $region17
    $region16: #{tpu_custom_call.1} parent=1 // pred_region
      %s42 = ssub.s32 8192, 8192
      %43 = vsyncadd [#allocation6], %s42
      %s44 = sshll.u32 [#allocation7], 4
      %s45 = int_to_ptr.vmem [resolvable:$true] %s44
      %50 = dma.hbm_to_vmem [thread:$0]  %s3, 8192, %s45, [#allocation6], 256, 256, 16
    $region17: #{tpu_custom_call.1} parent=1 // pred_fallthru
      _
    // Predicated region
    $region18: #{tpu_custom_call.1} parent=1 // pred_check
      _
    $region19: #{tpu_custom_call.1} parent=1 // pred_check_branch
      %52 = sbr.rel (0) target = $region21
    $region20: #{tpu_custom_call.1} parent=1 // pred_region
      _
    $region21: #{tpu_custom_call.1} parent=1 // pred_fallthru
      _
    // Predicated region
    $region22: #{tpu_custom_call.1} parent=1 // pred_check
      _
    $region23: #{tpu_custom_call.1} parent=1 // pred_check_branch
      %54 = sbr.rel (0) target = $region25
    $region24: #{tpu_custom_call.1} parent=1 // pred_region
      %55 = dma.done [#allocation3], 256
    $region25: #{tpu_custom_call.1} parent=1 // pred_fallthru
      _
    // Predicated region
    $region26: #{tpu_custom_call.1} parent=1 // pred_check
      _
    $region27: #{tpu_custom_call.1} parent=1 // pred_check_branch
      %57 = sbr.rel (0) target = $region29
    $region28: #{tpu_custom_call.1} parent=1 // pred_region
      %58 = dma.done [#allocation6], 1024
    $region29: #{tpu_custom_call.1} parent=1 // pred_fallthru
      _
    // Predicated region
    $region30: #{tpu_custom_call.1} parent=1 // pred_check
      _
    $region31: #{tpu_custom_call.1} parent=1 // pred_check_branch
      %60 = sbr.rel (0) target = $region33
    $region32: #{tpu_custom_call.1} parent=1 // pred_region
      %61 = dma.done [#allocation6], 8192
    $region33: #{tpu_custom_call.1} parent=1 // pred_fallthru
      _
    %v62 = vld [vmem:[#allocation2] sm:$0xff]
    %v63 = vld [vmem:[#allocation2 + $0x8] sm:$0xff]
    %v64 = vld [vmem:[#allocation5] sm:$0xff]
    %v65 = vld [vmem:[#allocation5 + $0x8] sm:$0xff]
    %v66 = vld [vmem:[#allocation5 + $0x10] sm:$0xff]
    %v67 = vld [vmem:[#allocation5 + $0x18] sm:$0xff]
    %v68 = vld [vmem:[#allocation5 + $0x20] sm:$0xff]
    %v69 = vld [vmem:[#allocation5 + $0x28] sm:$0xff]
    %v70 = vld [vmem:[#allocation5 + $0x30] sm:$0xff]
    %v71 = vld [vmem:[#allocation5 + $0x38] sm:$0xff]
    %v72 = vld [vmem:[%s2] sm:$0x3]
    %v74 = vlaneseq
    %v75 = vshrl.u32 %v74, 7
    %v76 = vsub.s32 0, %v75
    %v77 = vrot.slane %v72, %v76
    %v78 = vlaneseq
    %v79 = vshrl.u32 %v78, 7
    %v80 = vsub.s32 1, %v79
    %v81 = vrot.slane %v72, %v80
    %vm84 = vcmask 261120
    %v86 = vsel %vm84, %v62, 0
    %v89 = vsel %vm84, %v63, 0
    %91 = vmatprep.subr.mxu0 %v65
    %92 = vmatpush1.msra.mxu0 %v64
    %93 = vmatprep.subr.mxu0 %v67
    %94 = vmatpush1.msra.mxu0 %v66
    %95 = vmatprep.subr.mxu0 %v69
    %96 = vmatpush1.msra.mxu0 %v68
    %97 = vmatprep.subr.mxu0 %v71
    %98 = vmatpush1.msra.mxu0 %v70
    %99 = vmatprep.subr.mxu0 0.0
    %100 = vmatpush1.msra.mxu0 0.0
    %101 = vmatprep.subr.mxu0 0.0
    %102 = vmatpush1.msra.mxu0 0.0
    %103 = vmatprep.subr.mxu0 0.0
    %104 = vmatpush1.msra.mxu0 0.0
    %105 = vmatprep.subr.mxu0 0.0
    %106 = vmatpush1.msra.mxu0 0.0
    %107 = vmatprep.subr.mxu0 0.0
    %108 = vmatpush1.msra.mxu0 0.0
    %109 = vmatprep.subr.mxu0 0.0
    %110 = vmatpush1.msra.mxu0 0.0
    %111 = vmatprep.subr.mxu0 0.0
    %112 = vmatpush1.msra.mxu0 0.0
    %113 = vmatprep.subr.mxu0 0.0
    %114 = vmatpush1.msra.mxu0 0.0
    %115 = vmatprep.subr.mxu0 0.0
    %116 = vmatpush1.msra.mxu0 0.0
    %117 = vmatprep.subr.mxu0 0.0
    %118 = vmatpush1.msra.mxu0 0.0
    %119 = vmatprep.subr.mxu0 0.0
    %120 = vmatpush1.msra.mxu0 0.0
    %121 = vmatprep.subr.mxu0 0.0
    %122 = vmatpush1.msra.mxu0 0.0
    %123 = vmatprep.subr.mxu0 0.0
    %124 = vmatpush1.msra.mxu0 0.0
    %125 = vmatprep.subr.mxu0 0.0
    %126 = vmatpush1.msra.mxu0 0.0
    %127 = vmatprep.subr.mxu0 0.0
    %128 = vmatpush1.msra.mxu0 0.0
    %129 = vmatprep.subr.mxu0 0.0
    %130 = vmatpush1.msra.mxu0 0.0
    %131 = vmatprep.subr.mxu0 0.0
    %132 = vmatpush1.msra.mxu0 0.0
    %133 = vmatprep.subr.mxu0 0.0
    %134 = vmatpush1.msra.mxu0 0.0
    %135 = vmatprep.subr.mxu0 0.0
    %136 = vmatpush1.msra.mxu0 0.0
    %137 = vmatprep.subr.mxu0 0.0
    %138 = vmatpush1.msra.mxu0 0.0
    %139 = vmatprep.subr.mxu0 0.0
    %140 = vmatpush1.msra.mxu0 0.0
    %141 = vmatprep.subr.mxu0 0.0
    %142 = vmatpush1.msra.mxu0 0.0
    %143 = vmatprep.subr.mxu0 0.0
    %144 = vmatpush1.msra.mxu0 0.0
    %145 = vmatprep.subr.mxu0 0.0
    %146 = vmatpush1.msra.mxu0 0.0
    %147 = vmatprep.subr.mxu0 0.0
    %148 = vmatpush1.msra.mxu0 0.0
    %149 = vmatprep.subr.mxu0 0.0
    %150 = vmatpush1.msra.mxu0 0.0
    %151 = vmatprep.subr.mxu0 0.0
    %152 = vmatpush1.msra.mxu0 0.0
    %153 = vmatprep.subr.mxu0 0.0
    %154 = vmatpush1.msra.mxu0 0.0
    %155 = vmatprep.mubr.f32.mxu0 0.0
    %156 = vmatmul.mubr.f32.gmra.mrb[0].mxu0 %v86
    %v157 = vpop.f32.mrb[0].mxu0
    %v158 = vadd.f32 %v77, %v157
    %v159 = vpop.f32.mrb[0].mxu0
    %v160 = vadd.f32 %v81, %v159
    %161 = vmatprep.mubr.f32.mxu0 0.0
    %162 = vmatmul.mubr.f32.gmra.mrb[0].mxu0 %v89
    %v163 = vpop.f32.mrb[0].mxu0
    %v164 = vadd.f32 %v77, %v163
    %v165 = vpop.f32.mrb[0].mxu0
    %v166 = vadd.f32 %v81, %v165
    %167 = vdwg.mxu0
    %vm168 = vcmp.ge.f32.partialorder %v158, 0.0
    %vm169 = vcmp.ge.f32.partialorder %v160, 0.0
    %vm170 = vcmp.ge.f32.partialorder %v164, 0.0
    %vm171 = vcmp.ge.f32.partialorder %v166, 0.0
    %v172 = vmul.f32 %v158, 0.01
    %v173 = vmul.f32 %v160, 0.01
    %v174 = vmul.f32 %v164, 0.01
    %v175 = vmul.f32 %v166, 0.01
    %v176 = vsel %vm168, %v158, %v172
    %v177 = vsel %vm169, %v160, %v173
    %v178 = vsel %vm170, %v164, %v174
    %v179 = vsel %vm171, %v166, %v175
    %v180 = vld [vmem:[#allocation7] sm:$0xff]
    %v181 = vld [vmem:[#allocation7 + $0x8] sm:$0xff]
    %v182 = vld [vmem:[#allocation7 + $0x10] sm:$0xff]
    %v183 = vld [vmem:[#allocation7 + $0x18] sm:$0xff]
    %v184 = vld [vmem:[#allocation7 + $0x20] sm:$0xff]
    %v185 = vld [vmem:[#allocation7 + $0x28] sm:$0xff]
    %v186 = vld [vmem:[#allocation7 + $0x30] sm:$0xff]
    %v187 = vld [vmem:[#allocation7 + $0x38] sm:$0xff]
    %v188 = vld [vmem:[#allocation7 + $0x40] sm:$0xff]
    %v189 = vld [vmem:[#allocation7 + $0x48] sm:$0xff]
    %v190 = vld [vmem:[#allocation7 + $0x50] sm:$0xff]
    %v191 = vld [vmem:[#allocation7 + $0x58] sm:$0xff]
    %v192 = vld [vmem:[#allocation7 + $0x60] sm:$0xff]
    %v193 = vld [vmem:[#allocation7 + $0x68] sm:$0xff]
    %v194 = vld [vmem:[#allocation7 + $0x70] sm:$0xff]
    %v195 = vld [vmem:[#allocation7 + $0x78] sm:$0xff]
    %v196 = vld [vmem:[#allocation7 + $0x80] sm:$0xff]
    %v197 = vld [vmem:[#allocation7 + $0x88] sm:$0xff]
    %v198 = vld [vmem:[#allocation7 + $0x90] sm:$0xff]
    %v199 = vld [vmem:[#allocation7 + $0x98] sm:$0xff]
    %v200 = vld [vmem:[#allocation7 + $0xa0] sm:$0xff]
    %v201 = vld [vmem:[#allocation7 + $0xa8] sm:$0xff]
    %v202 = vld [vmem:[#allocation7 + $0xb0] sm:$0xff]
    %v203 = vld [vmem:[#allocation7 + $0xb8] sm:$0xff]
    %v204 = vld [vmem:[#allocation7 + $0xc0] sm:$0xff]
    %v205 = vld [vmem:[#allocation7 + $0xc8] sm:$0xff]
    %v206 = vld [vmem:[#allocation7 + $0xd0] sm:$0xff]
    %v207 = vld [vmem:[#allocation7 + $0xd8] sm:$0xff]
    %v208 = vld [vmem:[#allocation7 + $0xe0] sm:$0xff]
    %v209 = vld [vmem:[#allocation7 + $0xe8] sm:$0xff]
    %v210 = vld [vmem:[#allocation7 + $0xf0] sm:$0xff]
    %v211 = vld [vmem:[#allocation7 + $0xf8] sm:$0xff]
    %v212 = vld [vmem:[#allocation7 + $0x100] sm:$0xff]
    %v213 = vld [vmem:[#allocation7 + $0x108] sm:$0xff]
    %v214 = vld [vmem:[#allocation7 + $0x110] sm:$0xff]
    %v215 = vld [vmem:[#allocation7 + $0x118] sm:$0xff]
    %v216 = vld [vmem:[#allocation7 + $0x120] sm:$0xff]
    %v217 = vld [vmem:[#allocation7 + $0x128] sm:$0xff]
    %v218 = vld [vmem:[#allocation7 + $0x130] sm:$0xff]
    %v219 = vld [vmem:[#allocation7 + $0x138] sm:$0xff]
    %v220 = vld [vmem:[#allocation7 + $0x140] sm:$0xff]
    %v221 = vld [vmem:[#allocation7 + $0x148] sm:$0xff]
    %v222 = vld [vmem:[#allocation7 + $0x150] sm:$0xff]
    %v223 = vld [vmem:[#allocation7 + $0x158] sm:$0xff]
    %v224 = vld [vmem:[#allocation7 + $0x160] sm:$0xff]
    %v225 = vld [vmem:[#allocation7 + $0x168] sm:$0xff]
    %v226 = vld [vmem:[#allocation7 + $0x170] sm:$0xff]
    %v227 = vld [vmem:[#allocation7 + $0x178] sm:$0xff]
    %v228 = vld [vmem:[#allocation7 + $0x180] sm:$0xff]
    %v229 = vld [vmem:[#allocation7 + $0x188] sm:$0xff]
    %v230 = vld [vmem:[#allocation7 + $0x190] sm:$0xff]
    %v231 = vld [vmem:[#allocation7 + $0x198] sm:$0xff]
    %v232 = vld [vmem:[#allocation7 + $0x1a0] sm:$0xff]
    %v233 = vld [vmem:[#allocation7 + $0x1a8] sm:$0xff]
    %v234 = vld [vmem:[#allocation7 + $0x1b0] sm:$0xff]
    %v235 = vld [vmem:[#allocation7 + $0x1b8] sm:$0xff]
    %v236 = vld [vmem:[#allocation7 + $0x1c0] sm:$0xff]
    %v237 = vld [vmem:[#allocation7 + $0x1c8] sm:$0xff]
    %v238 = vld [vmem:[#allocation7 + $0x1d0] sm:$0xff]
    %v239 = vld [vmem:[#allocation7 + $0x1d8] sm:$0xff]
    %v240 = vld [vmem:[#allocation7 + $0x1e0] sm:$0xff]
    %v241 = vld [vmem:[#allocation7 + $0x1e8] sm:$0xff]
    %v242 = vld [vmem:[#allocation7 + $0x1f0] sm:$0xff]
    %v243 = vld [vmem:[#allocation7 + $0x1f8] sm:$0xff]
    %v244 = vld [vmem:[%s4] sm:$0x3]
    %v246 = vlaneseq
    %v247 = vshrl.u32 %v246, 7
    %v248 = vsub.s32 0, %v247
    %v249 = vrot.slane %v244, %v248
    %v250 = vlaneseq
    %v251 = vshrl.u32 %v250, 7
    %v252 = vsub.s32 1, %v251
    %v253 = vrot.slane %v244, %v252
    %256 = vmatprep.subr.mxu0 %v181
    %257 = vmatpush1.msra.mxu0 %v180
    %258 = vmatprep.subr.mxu0 %v183
    %259 = vmatpush1.msra.mxu0 %v182
    %260 = vmatprep.subr.mxu0 %v185
    %261 = vmatpush1.msra.mxu0 %v184
    %262 = vmatprep.subr.mxu0 %v187
    %263 = vmatpush1.msra.mxu0 %v186
    %264 = vmatprep.subr.mxu0 %v189
    %265 = vmatpush1.msra.mxu0 %v188
    %266 = vmatprep.subr.mxu0 %v191
    %267 = vmatpush1.msra.mxu0 %v190
    %268 = vmatprep.subr.mxu0 %v193
    %269 = vmatpush1.msra.mxu0 %v192
    %270 = vmatprep.subr.mxu0 %v195
    %271 = vmatpush1.msra.mxu0 %v194
    %272 = vmatprep.subr.mxu0 %v197
    %273 = vmatpush1.msra.mxu0 %v196
    %274 = vmatprep.subr.mxu0 %v199
    %275 = vmatpush1.msra.mxu0 %v198
    %276 = vmatprep.subr.mxu0 %v201
    %277 = vmatpush1.msra.mxu0 %v200
    %278 = vmatprep.subr.mxu0 %v203
    %279 = vmatpush1.msra.mxu0 %v202
    %280 = vmatprep.subr.mxu0 %v205
    %281 = vmatpush1.msra.mxu0 %v204
    %282 = vmatprep.subr.mxu0 %v207
    %283 = vmatpush1.msra.mxu0 %v206
    %284 = vmatprep.subr.mxu0 %v209
    %285 = vmatpush1.msra.mxu0 %v208
    %286 = vmatprep.subr.mxu0 %v211
    %287 = vmatpush1.msra.mxu0 %v210
    %288 = vmatprep.subr.mxu0 %v213
    %289 = vmatpush1.msra.mxu0 %v212
    %290 = vmatprep.subr.mxu0 %v215
    %291 = vmatpush1.msra.mxu0 %v214
    %292 = vmatprep.subr.mxu0 %v217
    %293 = vmatpush1.msra.mxu0 %v216
    %294 = vmatprep.subr.mxu0 %v219
    %295 = vmatpush1.msra.mxu0 %v218
    %296 = vmatprep.subr.mxu0 %v221
    %297 = vmatpush1.msra.mxu0 %v220
    %298 = vmatprep.subr.mxu0 %v223
    %299 = vmatpush1.msra.mxu0 %v222
    %300 = vmatprep.subr.mxu0 %v225
    %301 = vmatpush1.msra.mxu0 %v224
    %302 = vmatprep.subr.mxu0 %v227
    %303 = vmatpush1.msra.mxu0 %v226
    %304 = vmatprep.subr.mxu0 %v229
    %305 = vmatpush1.msra.mxu0 %v228
    %306 = vmatprep.subr.mxu0 %v231
    %307 = vmatpush1.msra.mxu0 %v230
    %308 = vmatprep.subr.mxu0 %v233
    %309 = vmatpush1.msra.mxu0 %v232
    %310 = vmatprep.subr.mxu0 %v235
    %311 = vmatpush1.msra.mxu0 %v234
    %312 = vmatprep.subr.mxu0 %v237
    %313 = vmatpush1.msra.mxu0 %v236
    %314 = vmatprep.subr.mxu0 %v239
    %315 = vmatpush1.msra.mxu0 %v238
    %316 = vmatprep.subr.mxu0 %v241
    %317 = vmatpush1.msra.mxu0 %v240
    %318 = vmatprep.subr.mxu0 %v243
    %319 = vmatpush1.msra.mxu0 %v242
    %320 = vmatprep.mubr.f32.mxu0 %v177
    %321 = vmatmul.mubr.f32.gmra.mrb[0].mxu0 %v176
    %v322 = vpop.f32.mrb[0].mxu0
    %v323 = vadd.f32 %v249, %v322
    %v324 = vpop.f32.mrb[0].mxu0
    %v325 = vadd.f32 %v253, %v324
    %326 = vmatprep.mubr.f32.mxu0 %v179
    %327 = vmatmul.mubr.f32.gmra.mrb[0].mxu0 %v178
    %v328 = vpop.f32.mrb[0].mxu0
    %v329 = vadd.f32 %v249, %v328
    %v330 = vpop.f32.mrb[0].mxu0
    %v331 = vadd.f32 %v253, %v330
    %332 = vdwg.mxu0
    %v333 = vtanh.pop %v323
    %v334 = vtanh.pop %v325
    %v335 = vtanh.pop %v329
    %v336 = vtanh.pop %v331
    %337 = vst [vmem:[#allocation8] sm:$0xff] %v333
    %338 = vst [vmem:[#allocation8 + $0x8] sm:$0xff] %v334
    %339 = vst [vmem:[#allocation8 + $0x10] sm:$0xff] %v335
    %340 = vst [vmem:[#allocation8 + $0x18] sm:$0xff] %v336
    // Predicated region
    $region34: #{tpu_custom_call.1} parent=1 // pred_check
      _
    $region35: #{tpu_custom_call.1} parent=1 // pred_check_branch
      %342 = sbr.rel (0) target = $region37
    $region36: #{tpu_custom_call.1} parent=1 // pred_region
      %s344 = ssub.s32 512, 512
      %345 = vsyncadd [#allocation4], %s344
      %s346 = sshll.u32 [#allocation8], 4
      %s347 = int_to_ptr.vmem [resolvable:$true] %s346
      %352 = dma.vmem_to_hbm [thread:$0]  %s347, 512, %s5, [#allocation4], 256, 256, 16
    $region37: #{tpu_custom_call.1} parent=1 // pred_fallthru
      _
    // Predicated region
    $region38: #{tpu_custom_call.1} parent=1 // pred_check
      _
    $region39: #{tpu_custom_call.1} parent=1 // pred_check_branch
      %354 = sbr.rel (0) target = $region41
    $region40: #{tpu_custom_call.1} parent=1 // pred_region
      %355 = dma.done [#allocation4], 512
    $region41: #{tpu_custom_call.1} parent=1 // pred_fallthru
      _
    %356 = vsyncpa [#allocation3], 1
    %357 = vsyncpa [#allocation6], 1
    %358 = vsyncpa [#allocation4], 1

</llo_original>
